<compile_context>
chip_gen: v7x
topology: tpu7x:2x2x1
jax: 0.10.0
libtpu: 0.0.40
codegen_flags: <defaults>
</compile_context>

<pallas_src>
import functools

import jax
import jax.numpy as jnp
from jax.experimental import pallas as pl
from jax.experimental.pallas import tpu as pltpu

_LANE = 128
_SUBLANE = 8


# ---------------------------------------------------------------------------
# VMEM budget / tiling helpers
# ---------------------------------------------------------------------------
def _vmem_limit_bytes():
    """Per-TC scoped-VMEM budget (generation aware, conservative fallback)."""
    try:
        cap = int(pltpu.get_tpu_info().vmem_capacity_bytes)
    except Exception:
        cap = 64 << 20  # v7x per-TC physical VMEM (safe everywhere)
    # Leave headroom for compiler temporaries / double-buffering bookkeeping.
    return max(16 << 20, min(int(cap * 0.7), 96 << 20))


def _channel_candidates(C, itemsize, c_cap=64):
    """Channel-tile candidates: multiples of the dtype's sublane packing that
    divide C (or [C] itself when C is not packable), capped to keep the
    (c_tile, 128) register accumulators small."""
    for step in (max(_SUBLANE, 32 // max(itemsize, 1)), _SUBLANE):
        if C % step == 0:
            return [m for m in range(step, min(C, c_cap) + 1, step) if C % m == 0]
    return [C]


def _pick_fused_c_tile(N, C, HW, itemsize, vmem_limit):
    """Channel tile for the fused one-pass training kernel, block=(N,c_tile,HW).
    Returns None when even the smallest channel block does not fit."""
    target = vmem_limit // 6  # 2x in + 2x out double-buffered blocks + headroom
    cands = _channel_candidates(C, itemsize)
    fitting = [m for m in cands if N * m * HW * itemsize <= target]
    if not fitting:
        return None
    two = [m for m in fitting if C // m >= 2]  # >=2 blocks -> v7x megacore
    return max(two) if two else max(fitting)


def _pick_block(N, C, HW, itemsize, vmem_limit):
    """(n_tile, c_tile) for the two-pass kernels: big HBM-roofline-friendly
    blocks, preferring >=2 channel blocks for megacore sharding."""
    target = vmem_limit // 8
    cands = _channel_candidates(C, itemsize)
    fitting = [m for m in cands if m * HW * itemsize <= target] or [min(cands)]
    two = [m for m in fitting if C // m >= 2]
    c_tile = max(two) if two else max(fitting)
    n_tile = 1
    for d in range(1, N + 1):
        if N % d == 0 and d * c_tile * HW * itemsize <= target:
            n_tile = d
    return n_tile, c_tile


# ---------------------------------------------------------------------------
# In-kernel reduction helper: per-channel sum / sum-of-squares of a block
# ---------------------------------------------------------------------------
def _block_sums(x_ref, n_count, c_tile, hw):
    """Sums over the (n_count, c_tile, hw) block.  When hw % 128 == 0 the
    accumulation folds lanes into (c_tile, 128) register accumulators using
    lane-aligned static slices (pure VPU adds); the single cross-lane (XLU)
    reduce happens once at the end.  Returns (sum, sumsq), each (c_tile, 1) f32."""
    chunks = hw // _LANE if hw % _LANE == 0 else 0
    width = _LANE if chunks else 1

    def body(n, carry):
        s, q = carry
        if chunks:
            for k in range(chunks):
                c = x_ref[n, :, k * _LANE:(k + 1) * _LANE].astype(jnp.float32)
                s = s + c
                q = q + c * c
        else:
            xr = x_ref[n].astype(jnp.float32)  # (c_tile, hw), masked lanes
            s = s + jnp.sum(xr, axis=-1, keepdims=True)
            q = q + jnp.sum(xr * xr, axis=-1, keepdims=True)
        return s, q

    init = (jnp.zeros((c_tile, width), jnp.float32),
            jnp.zeros((c_tile, width), jnp.float32))
    if n_count * max(chunks, 1) <= 64:
        # Short trip count: fully unroll so the LLO scheduler sees everything.
        s, q = init
        for n in range(n_count):
            s, q = body(n, (s, q))
    else:
        s, q = jax.lax.fori_loop(0, n_count, body, init)

    s = jnp.sum(s, axis=-1, keepdims=True)  # one XLU reduce per block
    q = jnp.sum(q, axis=-1, keepdims=True)
    return s, q


# ---------------------------------------------------------------------------
# Kernels
# ---------------------------------------------------------------------------
def _fused_bn_kernel(x_ref, gamma_ref, beta_ref, y_ref, mean_ref, var_ref, *,
                     inv_count, eps):
    """One pass: stats over the whole channel block, then y = x*scale+shift."""
    n, c_tile, hw = x_ref.shape
    s, q = _block_sums(x_ref, n, c_tile, hw)           # (c_tile, 1) each
    mean = s * inv_count
    var = q * inv_count - mean * mean                   # biased batch variance
    scale = gamma_ref[0] * jax.lax.rsqrt(var + eps)     # (c_tile, 1)
    shift = beta_ref[0] - mean * scale
    mean_ref[...] = mean[None]
    var_ref[...] = var[None]
    x = x_ref[...].astype(jnp.float32)                  # streamed from VMEM
    y_ref[...] = (x * scale[None] + shift[None]).astype(y_ref.dtype)


def _stats_kernel(x_ref, sum_ref, sq_ref):
    """Per-block partial sums (two-pass fallback).  No cross-grid accumulation,
    so both grid axes are 'parallel' and no VMEM scratch is needed."""
    n, c_tile, hw = x_ref.shape
    s, q = _block_sums(x_ref, n, c_tile, hw)
    sum_ref[...] = s[None]
    sq_ref[...] = q[None]


def _norm_kernel(x_ref, scale_ref, shift_ref, y_ref):
    """y = x * scale + shift with per-channel scale/shift (single FMA/elem)."""
    x = x_ref[...].astype(jnp.float32)                  # (n_tile, c_tile, HW)
    y_ref[...] = (x * scale_ref[...] + shift_ref[...]).astype(y_ref.dtype)


# ---------------------------------------------------------------------------
# pallas_call wrappers
# ---------------------------------------------------------------------------
def _fused_train(x3, gamma3, beta3, c_tile, eps, vmem_limit):
    N, C, HW = x3.shape
    inv_count = 1.0 / float(N * HW)
    return pl.pallas_call(
        functools.partial(_fused_bn_kernel, inv_count=inv_count, eps=float(eps)),
        out_shape=(
            jax.ShapeDtypeStruct((N, C, HW), x3.dtype),
            jax.ShapeDtypeStruct((1, C, 1), jnp.float32),
            jax.ShapeDtypeStruct((1, C, 1), jnp.float32),
        ),
        grid_spec=pltpu.PrefetchScalarGridSpec(
            num_scalar_prefetch=0,
            grid=(C // c_tile,),
            in_specs=[
                pl.BlockSpec((N, c_tile, HW), lambda ci: (0, ci, 0)),
                pl.BlockSpec((1, c_tile, 1), lambda ci: (0, ci, 0)),
                pl.BlockSpec((1, c_tile, 1), lambda ci: (0, ci, 0)),
            ],
            out_specs=(
                pl.BlockSpec((N, c_tile, HW), lambda ci: (0, ci, 0)),
                pl.BlockSpec((1, c_tile, 1), lambda ci: (0, ci, 0)),
                pl.BlockSpec((1, c_tile, 1), lambda ci: (0, ci, 0)),
            ),
        ),
        compiler_params=pltpu.CompilerParams(
            dimension_semantics=("parallel",),
            vmem_limit_bytes=vmem_limit),
    )(x3, gamma3, beta3)


def _channel_stats(x3, vmem_limit):
    """Two-pass fallback, pass 1: per-channel mean/var, shape (1, C, 1) f32."""
    N, C, HW = x3.shape
    itemsize = jnp.dtype(x3.dtype).itemsize
    n_tile, c_tile = _pick_block(N, C, HW, itemsize, vmem_limit)
    n_blocks = N // n_tile
    sums, sqs = pl.pallas_call(
        _stats_kernel,
        out_shape=(
            jax.ShapeDtypeStruct((n_blocks, C, 1), jnp.float32),
            jax.ShapeDtypeStruct((n_blocks, C, 1), jnp.float32),
        ),
        grid_spec=pltpu.PrefetchScalarGridSpec(
            num_scalar_prefetch=0,
            grid=(n_blocks, C // c_tile),
            in_specs=[pl.BlockSpec((n_tile, c_tile, HW),
                                   lambda ni, ci: (ni, ci, 0))],
            out_specs=(
                pl.BlockSpec((1, c_tile, 1), lambda ni, ci: (ni, ci, 0)),
                pl.BlockSpec((1, c_tile, 1), lambda ni, ci: (ni, ci, 0)),
            ),
        ),
        compiler_params=pltpu.CompilerParams(
            dimension_semantics=("parallel", "parallel"),
            vmem_limit_bytes=vmem_limit),
    )(x3)
    inv_count = 1.0 / float(N * HW)
    mean = jnp.sum(sums, axis=0, keepdims=True) * inv_count      # tiny glue
    var = jnp.sum(sqs, axis=0, keepdims=True) * inv_count - mean * mean
    return mean, var


def _apply_scale_shift(x3, scale, shift, vmem_limit):
    """y = x*scale + shift, scale/shift: (1, C, 1) f32."""
    N, C, HW = x3.shape
    itemsize = jnp.dtype(x3.dtype).itemsize
    n_tile, c_tile = _pick_block(N, C, HW, itemsize, vmem_limit)
    return pl.pallas_call(
        _norm_kernel,
        out_shape=jax.ShapeDtypeStruct((N, C, HW), x3.dtype),
        grid_spec=pltpu.PrefetchScalarGridSpec(
            num_scalar_prefetch=0,
            # Channel blocks outer, batch blocks inner: scale/shift block index
            # is invariant along the inner axis -> stays resident (no re-DMA).
            grid=(C // c_tile, N // n_tile),
            in_specs=[
                pl.BlockSpec((n_tile, c_tile, HW), lambda ci, ni: (ni, ci, 0)),
                pl.BlockSpec((1, c_tile, 1), lambda ci, ni: (0, ci, 0)),
                pl.BlockSpec((1, c_tile, 1), lambda ci, ni: (0, ci, 0)),
            ],
            out_specs=pl.BlockSpec((n_tile, c_tile, HW),
                                   lambda ci, ni: (ni, ci, 0)),
        ),
        compiler_params=pltpu.CompilerParams(
            dimension_semantics=("parallel", "parallel"),
            vmem_limit_bytes=vmem_limit),
    )(x3, scale, shift)


# ---------------------------------------------------------------------------
# Public forward (mirrors the module's batch_norm())
# ---------------------------------------------------------------------------
def batch_norm_pallas(x, gamma, beta, moving_mean, moving_var,
                      eps=1e-5, momentum=0.9, is_training=True,
                      force_two_pass=False):
    """Forward of the module's batch_norm.  x: (N, C) or (N, C, H, W).
    gamma/beta/moving_*: (1, C) or (1, C, 1, 1).
    Returns (Y, new_moving_mean, new_moving_var)."""
    ndim = x.ndim
    assert ndim in (2, 4)

    if ndim == 2:
        # TODO(synk): 2-D (fully-connected) BN path kept as plain JAX glue;
        # BatchNorm2d (num_dims=4) never takes it.
        if is_training:
            mean = jnp.mean(x, axis=0, keepdims=True)
            var = jnp.mean((x - mean) ** 2, axis=0, keepdims=True)
            x_hat = (x - mean) / jnp.sqrt(var + eps)
            new_mm = momentum * moving_mean + (1.0 - momentum) * mean
            new_mv = momentum * moving_var + (1.0 - momentum) * var
        else:
            x_hat = (x - moving_mean) / jnp.sqrt(moving_var + eps)
            new_mm, new_mv = moving_mean, moving_var
        return gamma * x_hat + beta, new_mm, new_mv

    N, C, H, W = x.shape
    HW = H * W
    # TODO(synk): for very small HW (e.g. 7x7=49) the lane axis is mostly
    # masked; a one-time relayout folding spatial+batch onto a 128-multiple
    # lane axis would recover lane bandwidth.  Not needed for these shapes.
    x3 = x.reshape(N, C, HW)            # stays NCHW: free reshape, no transpose
    itemsize = jnp.dtype(x3.dtype).itemsize
    vmem_limit = _vmem_limit_bytes()

    g = gamma.reshape(1, C, 1).astype(jnp.float32)
    b = beta.reshape(1, C, 1).astype(jnp.float32)

    if is_training:
        c_tile_fused = None if force_two_pass else _pick_fused_c_tile(
            N, C, HW, itemsize, vmem_limit)
        if c_tile_fused is not None:
            # Single HBM pass: read x once, write y once (+ tiny stats).
            y3, mean_c, var_c = _fused_train(x3, g, b, c_tile_fused, eps,
                                             vmem_limit)
        else:
            mean_c, var_c = _channel_stats(x3, vmem_limit)
            scale = g * jax.lax.rsqrt(var_c + jnp.float32(eps))
            shift = b - mean_c * scale
            y3 = _apply_scale_shift(x3, scale, shift, vmem_limit)
    else:
        mean_c = moving_mean.reshape(1, C, 1).astype(jnp.float32)
        var_c = moving_var.reshape(1, C, 1).astype(jnp.float32)
        scale = g * jax.lax.rsqrt(var_c + jnp.float32(eps))
        shift = b - mean_c * scale
        y3 = _apply_scale_shift(x3, scale, shift, vmem_limit)

    Y = y3.reshape(N, C, H, W)

    if is_training:
        # Module's (d2l-style) running-stat update: biased batch variance and
        # new = momentum*old + (1-momentum)*batch.  Intentionally matches the
        # reference batch_norm(), NOT torch.nn.BatchNorm2d's convention.
        mean_bc = mean_c.reshape(1, C, 1, 1)
        var_bc = var_c.reshape(1, C, 1, 1)
        new_mm = momentum * moving_mean + (1.0 - momentum) * mean_bc
        new_mv = momentum * moving_var + (1.0 - momentum) * var_bc
    else:
        new_mm, new_mv = moving_mean, moving_var

    return Y, new_mm, new_mv


# ---------------------------------------------------------------------------
# Self-test
# ---------------------------------------------------------------------------
def _reference(x, gamma, beta, moving_mean, moving_var, eps, momentum,
               is_training):
    if is_training:
        mean = jnp.mean(x, axis=(0, 2, 3), keepdims=True)
        var = jnp.mean((x - mean) ** 2, axis=(0, 2, 3), keepdims=True)
        x_hat = (x - mean) / jnp.sqrt(var + eps)
        mm = momentum * moving_mean + (1.0 - momentum) * mean
        mv = momentum * moving_var + (1.0 - momentum) * var
    else:
        x_hat = (x - moving_mean) / jnp.sqrt(moving_var + eps)
        mm, mv = moving_mean, moving_var
    return gamma * x_hat + beta, mm, mv


def _check_case(key, N, C, H, W, eps=1e-5, momentum=0.9, is_training=True,
                force_two_pass=False):
    kx, kg, kb = jax.random.split(key, 3)
    x = jax.random.normal(kx, (N, C, H, W), dtype=jnp.float32) * 2.0 + 0.5
    gamma = 1.0 + 0.1 * jax.random.normal(kg, (1, C, 1, 1), dtype=jnp.float32)
    beta = 0.1 * jax.random.normal(kb, (1, C, 1, 1), dtype=jnp.float32)
    moving_mean = jnp.zeros((1, C, 1, 1), jnp.float32)
    moving_var = jnp.ones((1, C, 1, 1), jnp.float32)

    Y, mm, mv = batch_norm_pallas(x, gamma, beta, moving_mean, moving_var,
                                  eps=eps, momentum=momentum,
                                  is_training=is_training,
                                  force_two_pass=force_two_pass)
    Y = jax.block_until_ready(Y)
    mm = jax.block_until_ready(mm)
    mv = jax.block_until_ready(mv)

    Y_ref, mm_ref, mv_ref = _reference(x, gamma, beta, moving_mean, moving_var,
                                       eps, momentum, is_training)
    assert jnp.allclose(Y, Y_ref, atol=1e-4, rtol=1e-4), "Y mismatch"
    assert jnp.allclose(mm, mm_ref, atol=1e-5, rtol=1e-5), "moving_mean mismatch"
    assert jnp.allclose(mv, mv_ref, atol=1e-4, rtol=1e-4), "moving_var mismatch"


if __name__ == "__main__":
    key = jax.random.PRNGKey(0)
    k1, k2, k3, k4 = jax.random.split(key, 4)

    # Small shape consistent with the module (BatchNorm2d, NCHW): fused path.
    _check_case(k1, N=2, C=4, H=16, W=16)
    # Multi-channel-block shape forced onto the two-pass (stats + norm) path.
    _check_case(k2, N=2, C=16, H=16, W=16, force_two_pass=True)
    # Eval mode (running stats): exercises the scale/shift-only kernel.
    _check_case(k3, N=2, C=4, H=16, W=16, is_training=False)
    # HW not a multiple of 128: exercises the masked-lane reduction fallback.
    _check_case(k4, N=2, C=8, H=12, W=12)

    print("KERNEL_OK")
</pallas_src>

<mosaic_0001>
module attributes {stable_mosaic.version = 11 : i64} {
  func.func @_fused_bn_kernel(%arg0: i32, %arg1: memref<2x4x256xf32, #tpu.memory_space<vmem>>, %arg2: memref<1x4x1xf32, #tpu.memory_space<vmem>>, %arg3: memref<1x4x1xf32, #tpu.memory_space<vmem>>, %arg4: memref<2x4x256xf32, #tpu.memory_space<vmem>>, %arg5: memref<1x4x1xf32, #tpu.memory_space<vmem>>, %arg6: memref<1x4x1xf32, #tpu.memory_space<vmem>>) attributes {dimension_semantics = [#tpu.dimension_semantics<parallel>], iteration_bounds = array<i64: 1>, scalar_prefetch = 0 : i64, scratch_operands = 0 : i64, tpu.core_type = #tpu.core_type<tc>, window_params = [{transform_indices = @transform_0, window_bounds = array<i64: 2, 4, 256>}, {transform_indices = @transform_1, window_bounds = array<i64: 1, 4, 1>}, {transform_indices = @transform_2, window_bounds = array<i64: 1, 4, 1>}, {transform_indices = @transform_3, window_bounds = array<i64: 2, 4, 256>}, {transform_indices = @transform_4, window_bounds = array<i64: 1, 4, 1>}, {transform_indices = @transform_5, window_bounds = array<i64: 1, 4, 1>}]} {
    %cst = arith.constant 0.000000e+00 : f32
    %0 = vector.broadcast %cst : f32 to vector<4x128xf32>
    %cst_0 = arith.constant 0.000000e+00 : f32
    %1 = vector.broadcast %cst_0 : f32 to vector<4x128xf32>
    %c0 = arith.constant 0 : index
    %c0_1 = arith.constant 0 : index
    %c0_2 = arith.constant 0 : index
    %2 = vector.load %arg1[%c0, %c0_1, %c0_2] : memref<2x4x256xf32, #tpu.memory_space<vmem>>, vector<1x4x128xf32>
    %3 = vector.shape_cast %2 : vector<1x4x128xf32> to vector<4x128xf32>
    %4 = arith.addf %0, %3 : vector<4x128xf32>
    %5 = arith.mulf %3, %3 : vector<4x128xf32>
    %6 = arith.addf %1, %5 : vector<4x128xf32>
    %c0_3 = arith.constant 0 : index
    %c0_4 = arith.constant 0 : index
    %c128 = arith.constant 128 : index
    %7 = vector.load %arg1[%c0_3, %c0_4, %c128] : memref<2x4x256xf32, #tpu.memory_space<vmem>>, vector<1x4x128xf32>
    %8 = vector.shape_cast %7 : vector<1x4x128xf32> to vector<4x128xf32>
    %9 = arith.addf %4, %8 : vector<4x128xf32>
    %10 = arith.mulf %8, %8 : vector<4x128xf32>
    %11 = arith.addf %6, %10 : vector<4x128xf32>
    %c1 = arith.constant 1 : index
    %c0_5 = arith.constant 0 : index
    %c0_6 = arith.constant 0 : index
    %12 = vector.load %arg1[%c1, %c0_5, %c0_6] : memref<2x4x256xf32, #tpu.memory_space<vmem>>, vector<1x4x128xf32>
    %13 = vector.shape_cast %12 : vector<1x4x128xf32> to vector<4x128xf32>
    %14 = arith.addf %9, %13 : vector<4x128xf32>
    %15 = arith.mulf %13, %13 : vector<4x128xf32>
    %16 = arith.addf %11, %15 : vector<4x128xf32>
    %c1_7 = arith.constant 1 : index
    %c0_8 = arith.constant 0 : index
    %c128_9 = arith.constant 128 : index
    %17 = vector.load %arg1[%c1_7, %c0_8, %c128_9] : memref<2x4x256xf32, #tpu.memory_space<vmem>>, vector<1x4x128xf32>
    %18 = vector.shape_cast %17 : vector<1x4x128xf32> to vector<4x128xf32>
    %19 = arith.addf %14, %18 : vector<4x128xf32>
    %20 = arith.mulf %18, %18 : vector<4x128xf32>
    %21 = arith.addf %16, %20 : vector<4x128xf32>
    %cst_10 = arith.constant dense<0.000000e+00> : vector<4xf32>
    %22 = vector.multi_reduction <add>, %19, %cst_10 [1] : vector<4x128xf32> to vector<4xf32>
    %23 = vector.shape_cast %22 : vector<4xf32> to vector<4x1xf32>
    %cst_11 = arith.constant dense<0.000000e+00> : vector<4xf32>
    %24 = vector.multi_reduction <add>, %21, %cst_11 [1] : vector<4x128xf32> to vector<4xf32>
    %25 = vector.shape_cast %24 : vector<4xf32> to vector<4x1xf32>
    %cst_12 = arith.constant 0.001953125 : f32
    %26 = vector.broadcast %cst_12 : f32 to vector<4x1xf32>
    %27 = arith.mulf %23, %26 : vector<4x1xf32>
    %cst_13 = arith.constant 0.001953125 : f32
    %28 = vector.broadcast %cst_13 : f32 to vector<4x1xf32>
    %29 = arith.mulf %25, %28 : vector<4x1xf32>
    %30 = arith.mulf %27, %27 : vector<4x1xf32>
    %31 = arith.subf %29, %30 : vector<4x1xf32>
    %c0_14 = arith.constant 0 : index
    %c0_15 = arith.constant 0 : index
    %c0_16 = arith.constant 0 : index
    %32 = vector.load %arg2[%c0_14, %c0_15, %c0_16] : memref<1x4x1xf32, #tpu.memory_space<vmem>>, vector<1x4x1xf32>
    %33 = vector.shape_cast %32 : vector<1x4x1xf32> to vector<4x1xf32>
    %cst_17 = arith.constant 9.99999974E-6 : f32
    %34 = vector.broadcast %cst_17 : f32 to vector<4x1xf32>
    %35 = arith.addf %31, %34 : vector<4x1xf32>
    %36 = math.rsqrt %35 : vector<4x1xf32>
    %37 = arith.mulf %33, %36 : vector<4x1xf32>
    %c0_18 = arith.constant 0 : index
    %c0_19 = arith.constant 0 : index
    %c0_20 = arith.constant 0 : index
    %38 = vector.load %arg3[%c0_18, %c0_19, %c0_20] : memref<1x4x1xf32, #tpu.memory_space<vmem>>, vector<1x4x1xf32>
    %39 = vector.shape_cast %38 : vector<1x4x1xf32> to vector<4x1xf32>
    %40 = arith.mulf %27, %37 : vector<4x1xf32>
    %41 = arith.subf %39, %40 : vector<4x1xf32>
    %42 = vector.shape_cast %27 : vector<4x1xf32> to vector<1x4x1xf32>
    %c0_21 = arith.constant 0 : index
    %c0_22 = arith.constant 0 : index
    %c0_23 = arith.constant 0 : index
    %43 = vector.load %arg5[%c0_21, %c0_22, %c0_23] : memref<1x4x1xf32, #tpu.memory_space<vmem>>, vector<1x4x1xf32>
    tpu.vector_store %arg5[%c0_21, %c0_22, %c0_23], %42 {strides = array<i32>} : memref<1x4x1xf32, #tpu.memory_space<vmem>>, vector<1x4x1xf32>,
    %44 = vector.shape_cast %31 : vector<4x1xf32> to vector<1x4x1xf32>
    %c0_24 = arith.constant 0 : index
    %c0_25 = arith.constant 0 : index
    %c0_26 = arith.constant 0 : index
    %45 = vector.load %arg6[%c0_24, %c0_25, %c0_26] : memref<1x4x1xf32, #tpu.memory_space<vmem>>, vector<1x4x1xf32>
    tpu.vector_store %arg6[%c0_24, %c0_25, %c0_26], %44 {strides = array<i32>} : memref<1x4x1xf32, #tpu.memory_space<vmem>>, vector<1x4x1xf32>,
    %c0_27 = arith.constant 0 : index
    %c0_28 = arith.constant 0 : index
    %c0_29 = arith.constant 0 : index
    %46 = vector.load %arg1[%c0_27, %c0_28, %c0_29] : memref<2x4x256xf32, #tpu.memory_space<vmem>>, vector<2x4x256xf32>
    %47 = vector.shape_cast %37 : vector<4x1xf32> to vector<1x4x1xf32>
    %48 = vector.broadcast %47 : vector<1x4x1xf32> to vector<2x4x256xf32>
    %49 = arith.mulf %46, %48 : vector<2x4x256xf32>
    %50 = vector.shape_cast %41 : vector<4x1xf32> to vector<1x4x1xf32>
    %51 = vector.broadcast %50 : vector<1x4x1xf32> to vector<2x4x256xf32>
    %52 = arith.addf %49, %51 : vector<2x4x256xf32>
    %c0_30 = arith.constant 0 : index
    %c0_31 = arith.constant 0 : index
    %c0_32 = arith.constant 0 : index
    %53 = vector.load %arg4[%c0_30, %c0_31, %c0_32] : memref<2x4x256xf32, #tpu.memory_space<vmem>>, vector<2x4x256xf32>
    tpu.vector_store %arg4[%c0_30, %c0_31, %c0_32], %52 {strides = array<i32>} : memref<2x4x256xf32, #tpu.memory_space<vmem>>, vector<2x4x256xf32>,
    return
  }
  func.func @transform_0(%arg0: i32) -> (i32, i32, i32) {
    %c0_i32 = arith.constant 0 : i32
    %c0_i32_0 = arith.constant 0 : i32
    %c0_i32_1 = arith.constant 0 : i32
    return %c0_i32, %arg0, %c0_i32_0 : i32, i32, i32
  }
  func.func @transform_1(%arg0: i32) -> (i32, i32, i32) {
    %c0_i32 = arith.constant 0 : i32
    %c0_i32_0 = arith.constant 0 : i32
    %c0_i32_1 = arith.constant 0 : i32
    return %c0_i32, %arg0, %c0_i32_0 : i32, i32, i32
  }
  func.func @transform_2(%arg0: i32) -> (i32, i32, i32) {
    %c0_i32 = arith.constant 0 : i32
    %c0_i32_0 = arith.constant 0 : i32
    %c0_i32_1 = arith.constant 0 : i32
    return %c0_i32, %arg0, %c0_i32_0 : i32, i32, i32
  }
  func.func @transform_3(%arg0: i32) -> (i32, i32, i32) {
    %c0_i32 = arith.constant 0 : i32
    %c0_i32_0 = arith.constant 0 : i32
    %c0_i32_1 = arith.constant 0 : i32
    return %c0_i32, %arg0, %c0_i32_0 : i32, i32, i32
  }
  func.func @transform_4(%arg0: i32) -> (i32, i32, i32) {
    %c0_i32 = arith.constant 0 : i32
    %c0_i32_0 = arith.constant 0 : i32
    %c0_i32_1 = arith.constant 0 : i32
    return %c0_i32, %arg0, %c0_i32_0 : i32, i32, i32
  }
  func.func @transform_5(%arg0: i32) -> (i32, i32, i32) {
    %c0_i32 = arith.constant 0 : i32
    %c0_i32_0 = arith.constant 0 : i32
    %c0_i32_1 = arith.constant 0 : i32
    return %c0_i32, %arg0, %c0_i32_0 : i32, i32, i32
  }
}

</mosaic_0001>

<llo_original>
// kernel: tpu_custom_call.1
$region0: #{tpu_custom_call.1}
  #allocation0 [shape = 'u32[]', space=smem, size = 0x4, offset = 0x4, fixed_abs, tag = 'smem constant byte address 0x4 - core index']
  #allocation1 [shape = 'u32[144,128]{1,0:T(1,128)}', space=vmem, size = 0x12000, scoped, tag = 'internal scratch']
  %s0 = inlined_call_operand.hbm [shape: f32[2,4,256], index: 0, kind: input, shape index: {}]
  %s1 = inlined_call_operand.vmem [shape: f32[1,4,1], index: 1, kind: input, shape index: {}]
  %s2 = inlined_call_operand.vmem [shape: f32[1,4,1], index: 2, kind: input, shape index: {}]
  %s3 = inlined_call_operand.hbm [shape: f32[2,4,256], index: 3, kind: output, shape index: {0}]
  %s4 = inlined_call_operand.vmem [shape: f32[1,4,1], index: 4, kind: output, shape index: {1}]
  %s5 = inlined_call_operand.vmem [shape: f32[1,4,1], index: 5, kind: output, shape index: {2}]
  %6 = xla_tuple %s3, %s4, %s5
  %s7 = sld [smem:[#allocation0]]
  $region42: #{tpu_custom_call.1} parent=0
    _
  %s9 = ssub.s32 1, %s7
  %s10 = scalar_select 0, %s9, %s7
  $region1: #{tpu_custom_call.1} parent=0
    #allocation2 [shape = 'u8[8192]{0}', space=vmem, size = 0x2000, scoped, tag = 'input window, operand 0, single buffered']
    #allocation3 [shape = 's32[1]{0}', space=sflag, size = 0x4, scoped, tag = 'scoped memory for tpu_custom_call.1']
    #allocation4 [shape = 's32[1]{0}', space=sflag, size = 0x4, scoped, tag = 'scoped memory for tpu_custom_call.1']
    #allocation5 [shape = 'u8[8192]{0}', space=vmem, size = 0x2000, scoped, tag = 'output window, operand 0, single buffered']
    %11 = vsyncpa [#allocation3], 0
    %12 = vsyncpa [#allocation4], 0
    // Predicated region
    $region2: #{tpu_custom_call.1} parent=1 // pred_check
      _
    $region3: #{tpu_custom_call.1} parent=1 // pred_check_branch
      %14 = sbr.rel (0) target = $region5
    $region4: #{tpu_custom_call.1} parent=1 // pred_region
      %s16 = ssub.s32 256, 256
      %17 = vsyncadd [#allocation3], %s16
      %s18 = sshll.u32 [#allocation2], 4
      %s19 = int_to_ptr.vmem [resolvable:$true] %s18
      %24 = dma.hbm_to_vmem [thread:$0]  %s0, 256, %s19, [#allocation3], 128, 128, 8
    $region5: #{tpu_custom_call.1} parent=1 // pred_fallthru
      _
    // Predicated region
    $region6: #{tpu_custom_call.1} parent=1 // pred_check
      _
    $region7: #{tpu_custom_call.1} parent=1 // pred_check_branch
      %26 = sbr.rel (0) target = $region9
    $region8: #{tpu_custom_call.1} parent=1 // pred_region
      _
    $region9: #{tpu_custom_call.1} parent=1 // pred_fallthru
      _
    // Predicated region
    $region10: #{tpu_custom_call.1} parent=1 // pred_check
      _
    $region11: #{tpu_custom_call.1} parent=1 // pred_check_branch
      %28 = sbr.rel (0) target = $region13
    $region12: #{tpu_custom_call.1} parent=1 // pred_region
      _
    $region13: #{tpu_custom_call.1} parent=1 // pred_fallthru
      _
    // Predicated region
    $region14: #{tpu_custom_call.1} parent=1 // pred_check
      _
    $region15: #{tpu_custom_call.1} parent=1 // pred_check_branch
      %30 = sbr.rel (0) target = $region17
    $region16: #{tpu_custom_call.1} parent=1 // pred_region
      %31 = dma.done [#allocation3], 256
    $region17: #{tpu_custom_call.1} parent=1 // pred_fallthru
      _
    %v32 = vld [vmem:[#allocation2] sm:$0xf]
    %v33 = vadd.f32 %v32, 0.0
    %v34 = vmul.f32 %v32, %v32
    %v35 = vadd.f32 %v34, 0.0
    %v36 = vld [vmem:[#allocation2 + $0x4] sm:$0xf]
    %v37 = vadd.f32 %v33, %v36
    %v38 = vmul.f32 %v36, %v36
    %v39 = vadd.f32 %v35, %v38
    %s40 = scalar_lea.vmem [#allocation2], 8
    %v41 = vld [vmem:[%s40] sm:$0xf]
    %v42 = vadd.f32 %v37, %v41
    %v43 = vmul.f32 %v41, %v41
    %v44 = vadd.f32 %v39, %v43
    %v45 = vld [vmem:[%s40 + $0x4] sm:$0xf]
    %v46 = vadd.f32 %v42, %v45
    %v47 = vmul.f32 %v45, %v45
    %v48 = vadd.f32 %v44, %v47
    %vm49 = vcmask 1043456
    %v50 = vsel %vm49, %v46, 0.0
    %51 = vadd.xlane.f32.xlu0 %v50
    %v52 = vpop.xlane.xlu0 %51
    %v53 = vsel %vm49, %v48, 0.0
    %54 = vadd.xlane.f32.xlu0 %v53
    %v55 = vpop.xlane.xlu0 %54
    %v56 = vmul.f32 %v52, 0.001953125
    %v57 = vmul.f32 %v55, 0.001953125
    %v58 = vmul.f32 %v56, %v56
    %v59 = vsub.f32 %v57, %v58
    %v60 = vld [vmem:[%s1] sm:$0xf]
    %v61 = vadd.f32 %v59, 1e-05
    %v62 = vrsqrt.pop %v61
    %v63 = vmul.f32 %v60, %v62
    %v64 = vld [vmem:[%s2] sm:$0xf]
    %v65 = vmul.f32 %v56, %v63
    %v66 = vsub.f32 %v64, %v65
    %vm67 = vcmask 3072
    %68 = vst.msk [vmem:[%s4] sm:$0xf] %vm67, %v56
    %69 = vst.msk [vmem:[%s5] sm:$0xf] %vm67, %v59
    %v70 = vld [vmem:[#allocation2] sm:$0xff]
    %v71 = vld [vmem:[#allocation2 + $0x8] sm:$0xff]
    %73 = vset.pattern.permute.xlu0 0
    %74 = vperm.xlu0 %73, %v63
    %v75 = vpop.permute.xlu0 %74
    %v77 = vunpack.c.l.s4 839922192
    %v78 = vunpack.c.0.s8 %v77
    %v79 = vlaneseq
    %v80 = vshrl.u32 %v79, 7
    %v81 = vsub.s32 %v78, %v80
    %v82 = vrot.slane %v75, %v81
    %v84 = vmul.f32 %v70, %v82
    %v85 = vmul.f32 %v71, %v82
    %87 = vset.pattern.permute.xlu0 0
    %88 = vperm.xlu0 %87, %v66
    %v89 = vpop.permute.xlu0 %88
    %v91 = vunpack.c.l.s4 839922192
    %v92 = vunpack.c.0.s8 %v91
    %v93 = vlaneseq
    %v94 = vshrl.u32 %v93, 7
    %v95 = vsub.s32 %v92, %v94
    %v96 = vrot.slane %v89, %v95
    %v98 = vadd.f32 %v84, %v96
    %v99 = vadd.f32 %v85, %v96
    %100 = vst [vmem:[#allocation5] sm:$0xff] %v98
    %101 = vst [vmem:[#allocation5 + $0x8] sm:$0xff] %v99
    // Predicated region
    $region18: #{tpu_custom_call.1} parent=1 // pred_check
      _
    $region19: #{tpu_custom_call.1} parent=1 // pred_check_branch
      %103 = sbr.rel (0) target = $region21
    $region20: #{tpu_custom_call.1} parent=1 // pred_region
      %s105 = ssub.s32 256, 256
      %106 = vsyncadd [#allocation4], %s105
      %s107 = sshll.u32 [#allocation5], 4
      %s108 = int_to_ptr.vmem [resolvable:$true] %s107
      %113 = dma.vmem_to_hbm [thread:$0]  %s108, 256, %s3, [#allocation4], 128, 128, 8
    $region21: #{tpu_custom_call.1} parent=1 // pred_fallthru
      _
    // Predicated region
    $region22: #{tpu_custom_call.1} parent=1 // pred_check
      _
    $region23: #{tpu_custom_call.1} parent=1 // pred_check_branch
      %115 = sbr.rel (0) target = $region25
    $region24: #{tpu_custom_call.1} parent=1 // pred_region
      _
    $region25: #{tpu_custom_call.1} parent=1 // pred_fallthru
      _
    // Predicated region
    $region26: #{tpu_custom_call.1} parent=1 // pred_check
      _
    $region27: #{tpu_custom_call.1} parent=1 // pred_check_branch
      %117 = sbr.rel (0) target = $region29
    $region28: #{tpu_custom_call.1} parent=1 // pred_region
      _
    $region29: #{tpu_custom_call.1} parent=1 // pred_fallthru
      _
    // Predicated region
    $region30: #{tpu_custom_call.1} parent=1 // pred_check
      _
    $region31: #{tpu_custom_call.1} parent=1 // pred_check_branch
      %119 = sbr.rel (0) target = $region33
    $region32: #{tpu_custom_call.1} parent=1 // pred_region
      %120 = dma.done [#allocation4], 256
    $region33: #{tpu_custom_call.1} parent=1 // pred_fallthru
      _
    // Predicated region
    $region34: #{tpu_custom_call.1} parent=1 // pred_check
      _
    $region35: #{tpu_custom_call.1} parent=1 // pred_check_branch
      %122 = sbr.rel (0) target = $region37
    $region36: #{tpu_custom_call.1} parent=1 // pred_region
      _
    $region37: #{tpu_custom_call.1} parent=1 // pred_fallthru
      _
    // Predicated region
    $region38: #{tpu_custom_call.1} parent=1 // pred_check
      _
    $region39: #{tpu_custom_call.1} parent=1 // pred_check_branch
      %124 = sbr.rel (0) target = $region41
    $region40: #{tpu_custom_call.1} parent=1 // pred_region
      _
    $region41: #{tpu_custom_call.1} parent=1 // pred_fallthru
      _
    %125 = vsyncpa [#allocation3], 1
    %126 = vsyncpa [#allocation4], 1

</llo_original>
